<compile_context>
chip_gen: v7x
topology: tpu7x:2x2x1
jax: 0.10.0
libtpu: 0.0.40
codegen_flags: <defaults>
</compile_context>

<pallas_src>
import jax
import jax.numpy as jnp
from jax.experimental import pallas as pl
from jax.experimental.pallas import tpu as pltpu

BN_EPS = 1e-5


def _round_up(v, m):
    return (v + m - 1) // m * m


def _pick_tn(dout_p):
    # 256-wide tiles fill the v6e/v7x MXU; but keep at least 2 j-tiles when the
    # feature dim allows so the v7x megacore "parallel" axis has work for both TCs.
    if dout_p % 256 == 0 and dout_p >= 512:
        return 256
    return 128


def linear_block_kernel(x_ref, w_ref, p_ref, o_ref):
    """One (full-batch, tn) output tile. Single K pass: Linear + ReLU + BN epilogue."""
    # MXU matmul: operands stay in their native dtype, accumulate in f32.
    y = jnp.dot(x_ref[...], w_ref[...], preferred_element_type=jnp.float32)

    # Bias + ReLU in f32 (p_ref rows: 0=bias, 1=gamma, 2=beta).
    bias = p_ref[0:1, :].astype(jnp.float32)
    y = jnp.maximum(y + bias, 0.0)

    # BatchNorm1d (training mode, biased variance) over the FULL batch axis.
    # Two-pass stats (mean, then centered sum of squares) for numerical robustness:
    # post-ReLU activations are non-negative with nonzero mean, where the
    # single-pass E[y^2]-E[y]^2 form cancels badly.
    inv_n = 1.0 / y.shape[0]
    mean = jnp.sum(y, axis=0, keepdims=True) * inv_n
    centered = y - mean
    var = jnp.sum(centered * centered, axis=0, keepdims=True) * inv_n
    inv_std = jax.lax.rsqrt(var + BN_EPS)

    gamma = p_ref[1:2, :].astype(jnp.float32)
    beta = p_ref[2:3, :].astype(jnp.float32)
    o_ref[...] = (centered * (gamma * inv_std) + beta).astype(o_ref.dtype)


def prepare_params(w, b, gamma, beta):
    """Pad weight/params along Dout ONCE (outside the per-call hot path) and pack
    bias/gamma/beta into a single (3, dout_p) array. Returns (w_p, params_p, Dout, tn)."""
    _, Dout = w.shape
    dout_p = _round_up(Dout, 128)
    tn = _pick_tn(dout_p)
    pad = dout_p - Dout
    w_p = jnp.pad(w, ((0, 0), (0, pad)))
    params = jnp.concatenate([b, gamma, beta], axis=0)  # (3, Dout)
    params_p = jnp.pad(params, ((0, 0), (0, pad)))
    return w_p, params_p, Dout, tn


def linear_block(x, w_p, params_p, dout, tn):
    """x: (B, Din) unpadded; w_p: (Din, dout_p) pre-padded; params_p: (3, dout_p)."""
    B, Din = x.shape
    dout_p = w_p.shape[1]
    n_j = dout_p // tn

    x_bytes = jnp.dtype(x.dtype).itemsize
    w_bytes = jnp.dtype(w_p.dtype).itemsize
    p_bytes = jnp.dtype(params_p.dtype).itemsize

    # VMEM footprint: resident x (single-buffered, constant index map) +
    # double-buffered W / out / param blocks + f32 epilogue temporaries.
    footprint = (B * Din * x_bytes
                 + 2 * Din * tn * w_bytes
                 + 2 * B * tn * x_bytes
                 + 2 * 8 * tn * p_bytes
                 + 4 * B * tn * 4)
    vmem_budget = 48 << 20  # conservative: fits within v7x's 64 MiB physical VMEM
    if footprint > vmem_budget:
        # TODO(synk): K/batch-tiled fallback with cross-tile BN partial sums.
        raise NotImplementedError(
            "full-batch-resident LinearBlock tile exceeds the VMEM budget; "
            "a K/batch-tiled variant with cross-tile BN stats is required.")

    cost = pl.CostEstimate(
        flops=2 * B * Din * dout_p + 10 * B * dout_p,
        transcendentals=dout_p,
        bytes_accessed=(B * Din + Din * dout_p + 3 * dout_p + B * dout_p) * x_bytes,
    )

    out_p = pl.pallas_call(
        linear_block_kernel,
        out_shape=jax.ShapeDtypeStruct((B, dout_p), x.dtype),
        grid_spec=pltpu.PrefetchScalarGridSpec(
            num_scalar_prefetch=0,
            grid=(n_j,),
            in_specs=[
                pl.BlockSpec((B, Din), lambda j: (0, 0)),    # x: full-extent, resident
                pl.BlockSpec((Din, tn), lambda j: (0, j)),   # W column tile
                pl.BlockSpec((3, tn), lambda j: (0, j)),     # packed bias/gamma/beta
            ],
            out_specs=pl.BlockSpec((B, tn), lambda j: (0, j)),
        ),
        compiler_params=pltpu.CompilerParams(
            dimension_semantics=("parallel",),
            vmem_limit_bytes=int(min(max(2 * footprint, 16 << 20), 64 << 20)),
        ),
        cost_estimate=cost,
    )(x, w_p, params_p)

    return out_p[:, :dout] if dout != dout_p else out_p


def reference(x, w, b, gamma, beta):
    y = x @ w + b
    y = jnp.maximum(y, 0.0)
    mean = jnp.mean(y, axis=0, keepdims=True)
    var = jnp.mean((y - mean) ** 2, axis=0, keepdims=True)
    return (y - mean) / jnp.sqrt(var + BN_EPS) * gamma + beta


def _make_inputs(key, B, Din, Dout, dtype=jnp.float32):
    kx, kw, kb = jax.random.split(key, 3)
    bound = 1.0 / (Din ** 0.5)
    x = jax.random.normal(kx, (B, Din), dtype=dtype)
    w = jax.random.uniform(kw, (Din, Dout), minval=-bound, maxval=bound, dtype=dtype)
    b = jax.random.uniform(kb, (1, Dout), minval=-bound, maxval=bound, dtype=dtype)
    gamma = jnp.ones((1, Dout), dtype=dtype)   # BatchNorm1d weight init
    beta = jnp.zeros((1, Dout), dtype=dtype)   # BatchNorm1d bias init
    return x, w, b, gamma, beta


if __name__ == "__main__":
    key = jax.random.PRNGKey(0)
    k1, k2 = jax.random.split(key)

    # Case 1: small module-sized shapes (single j tile; exercises the Dout-padding
    # path done once at parameter-prep time — x itself is never padded/copied).
    x, w, b, g, be = _make_inputs(k1, B=8, Din=32, Dout=32)
    w_p, p_p, dout, tn = prepare_params(w, b, g, be)
    out = jax.block_until_ready(linear_block(x, w_p, p_p, dout, tn))
    ref = reference(x, w, b, g, be)
    assert out.shape == ref.shape
    assert jnp.allclose(out, ref, atol=1e-4, rtol=1e-4), "case1 mismatch vs reference"

    # Case 2: larger shapes that exercise the real j grid (n_j = 3, no padding, no
    # final slice; x loaded into VMEM exactly once and reused across all tiles).
    x, w, b, g, be = _make_inputs(k2, B=128, Din=384, Dout=384)
    w_p, p_p, dout, tn = prepare_params(w, b, g, be)
    out = jax.block_until_ready(linear_block(x, w_p, p_p, dout, tn))
    ref = reference(x, w, b, g, be)
    assert out.shape == ref.shape
    assert jnp.allclose(out, ref, atol=1e-4, rtol=1e-4), "case2 mismatch vs reference"

    print("KERNEL_OK")
</pallas_src>

<mosaic_0001>
module attributes {stable_mosaic.version = 11 : i64} {
  func.func @linear_block_kernel(%arg0: i32, %arg1: memref<8x32xf32, #tpu.memory_space<vmem>>, %arg2: memref<32x128xf32, #tpu.memory_space<vmem>>, %arg3: memref<3x128xf32, #tpu.memory_space<vmem>>, %arg4: memref<8x128xf32, #tpu.memory_space<vmem>>) attributes {dimension_semantics = [#tpu.dimension_semantics<parallel>], iteration_bounds = array<i64: 1>, scalar_prefetch = 0 : i64, scratch_operands = 0 : i64, tpu.core_type = #tpu.core_type<tc>, window_params = [{pipeline_mode = #tpu.pipeline_mode<synchronous>, transform_indices = @transform_0, window_bounds = array<i64: 8, 32>}, {transform_indices = @transform_1, window_bounds = array<i64: 32, 128>}, {transform_indices = @transform_2, window_bounds = array<i64: 3, 128>}, {transform_indices = @transform_3, window_bounds = array<i64: 8, 128>}]} {
    %c0 = arith.constant 0 : index
    %c0_0 = arith.constant 0 : index
    %0 = vector.load %arg1[%c0, %c0_0] : memref<8x32xf32, #tpu.memory_space<vmem>>, vector<8x32xf32>
    %c0_1 = arith.constant 0 : index
    %c0_2 = arith.constant 0 : index
    %1 = vector.load %arg2[%c0_1, %c0_2] : memref<32x128xf32, #tpu.memory_space<vmem>>, vector<32x128xf32>
    %cst = arith.constant dense<0.000000e+00> : vector<8x128xf32>
    %2 = tpu.matmul %0, %1, %cst {dimension_numbers = #tpu.dot_dimension_numbers<[1], [0], [0], [1], [0, 0, 1, 1], [], []>} : vector<8x32xf32>, vector<32x128xf32>, vector<8x128xf32> -> vector<8x128xf32>
    %c0_3 = arith.constant 0 : index
    %c0_4 = arith.constant 0 : index
    %3 = vector.load %arg3[%c0_3, %c0_4] : memref<3x128xf32, #tpu.memory_space<vmem>>, vector<1x128xf32>
    %4 = vector.broadcast %3 : vector<1x128xf32> to vector<8x128xf32>
    %5 = arith.addf %2, %4 : vector<8x128xf32>
    %cst_5 = arith.constant 0.000000e+00 : f32
    %6 = vector.broadcast %cst_5 : f32 to vector<8x128xf32>
    %7 = arith.maximumf %5, %6 : vector<8x128xf32>
    %cst_6 = arith.constant dense<0.000000e+00> : vector<128xf32>
    %8 = vector.multi_reduction <add>, %7, %cst_6 [0] : vector<8x128xf32> to vector<128xf32>
    %9 = vector.shape_cast %8 : vector<128xf32> to vector<1x128xf32>
    %cst_7 = arith.constant 1.250000e-01 : f32
    %10 = vector.broadcast %cst_7 : f32 to vector<1x128xf32>
    %11 = arith.mulf %9, %10 : vector<1x128xf32>
    %12 = vector.broadcast %11 : vector<1x128xf32> to vector<8x128xf32>
    %13 = arith.subf %7, %12 : vector<8x128xf32>
    %14 = arith.mulf %13, %13 : vector<8x128xf32>
    %cst_8 = arith.constant dense<0.000000e+00> : vector<128xf32>
    %15 = vector.multi_reduction <add>, %14, %cst_8 [0] : vector<8x128xf32> to vector<128xf32>
    %16 = vector.shape_cast %15 : vector<128xf32> to vector<1x128xf32>
    %cst_9 = arith.constant 1.250000e-01 : f32
    %17 = vector.broadcast %cst_9 : f32 to vector<1x128xf32>
    %18 = arith.mulf %16, %17 : vector<1x128xf32>
    %cst_10 = arith.constant 9.99999974E-6 : f32
    %19 = vector.broadcast %cst_10 : f32 to vector<1x128xf32>
    %20 = arith.addf %18, %19 : vector<1x128xf32>
    %21 = math.rsqrt %20 : vector<1x128xf32>
    %c1 = arith.constant 1 : index
    %c0_11 = arith.constant 0 : index
    %22 = vector.load %arg3[%c1, %c0_11] : memref<3x128xf32, #tpu.memory_space<vmem>>, vector<1x128xf32>
    %c2 = arith.constant 2 : index
    %c0_12 = arith.constant 0 : index
    %23 = vector.load %arg3[%c2, %c0_12] : memref<3x128xf32, #tpu.memory_space<vmem>>, vector<1x128xf32>
    %24 = arith.mulf %22, %21 : vector<1x128xf32>
    %25 = vector.broadcast %24 : vector<1x128xf32> to vector<8x128xf32>
    %26 = arith.mulf %13, %25 : vector<8x128xf32>
    %27 = vector.broadcast %23 : vector<1x128xf32> to vector<8x128xf32>
    %28 = arith.addf %26, %27 : vector<8x128xf32>
    %c0_13 = arith.constant 0 : index
    %c0_14 = arith.constant 0 : index
    %29 = vector.load %arg4[%c0_13, %c0_14] : memref<8x128xf32, #tpu.memory_space<vmem>>, vector<8x128xf32>
    tpu.vector_store %arg4[%c0_13, %c0_14], %28 {strides = array<i32>} : memref<8x128xf32, #tpu.memory_space<vmem>>, vector<8x128xf32>,
    return
  }
  func.func @transform_0(%arg0: i32) -> (i32, i32) {
    %c0_i32 = arith.constant 0 : i32
    %c0_i32_0 = arith.constant 0 : i32
    %c0_i32_1 = arith.constant 0 : i32
    return %c0_i32, %c0_i32_0 : i32, i32
  }
  func.func @transform_1(%arg0: i32) -> (i32, i32) {
    %c0_i32 = arith.constant 0 : i32
    %c0_i32_0 = arith.constant 0 : i32
    return %c0_i32, %arg0 : i32, i32
  }
  func.func @transform_2(%arg0: i32) -> (i32, i32) {
    %c0_i32 = arith.constant 0 : i32
    %c0_i32_0 = arith.constant 0 : i32
    return %c0_i32, %arg0 : i32, i32
  }
  func.func @transform_3(%arg0: i32) -> (i32, i32) {
    %c0_i32 = arith.constant 0 : i32
    %c0_i32_0 = arith.constant 0 : i32
    return %c0_i32, %arg0 : i32, i32
  }
}

</mosaic_0001>

<llo_original>
// kernel: tpu_custom_call.1
$region0: #{tpu_custom_call.1}
  #allocation0 [shape = 'u32[]', space=smem, size = 0x4, offset = 0x4, fixed_abs, tag = 'smem constant byte address 0x4 - core index']
  #allocation1 [shape = 'u32[144,128]{1,0:T(1,128)}', space=vmem, size = 0x12000, scoped, tag = 'internal scratch']
  %s0 = inlined_call_operand.hbm [shape: f32[8,32], index: 0, kind: input, shape index: {}]
  %s1 = inlined_call_operand.hbm [shape: f32[32,128], index: 1, kind: input, shape index: {}]
  %s2 = inlined_call_operand.vmem [shape: f32[3,128], index: 2, kind: input, shape index: {}]
  %s3 = inlined_call_operand.hbm [shape: f32[8,128], index: 3, kind: output, shape index: {}]
  %s4 = sld [smem:[#allocation0]]
  $region30: #{tpu_custom_call.1} parent=0
    _
  %s6 = ssub.s32 1, %s4
  %s7 = scalar_select 0, %s6, %s4
  $region1: #{tpu_custom_call.1} parent=0
    #allocation2 [shape = 'u8[4096]{0}', space=vmem, size = 0x1000, scoped, tag = 'input window, operand 0, single buffered']
    #allocation3 [shape = 's32[1]{0}', space=sflag, size = 0x4, scoped, tag = 'scoped memory for tpu_custom_call.1']
    #allocation4 [shape = 's32[1]{0}', space=sflag, size = 0x4, scoped, tag = 'scoped memory for tpu_custom_call.1']
    #allocation5 [shape = 'u8[16384]{0}', space=vmem, size = 0x4000, scoped, tag = 'input window, operand 1, single buffered']
    #allocation6 [shape = 's32[1]{0}', space=sflag, size = 0x4, scoped, tag = 'scoped memory for tpu_custom_call.1']
    #allocation7 [shape = 'u8[4096]{0}', space=vmem, size = 0x1000, scoped, tag = 'output window, operand 0, single buffered']
    %8 = vsyncpa [#allocation3], 0
    %9 = vsyncpa [#allocation6], 0
    %10 = vsyncpa [#allocation4], 0
    // Predicated region
    $region2: #{tpu_custom_call.1} parent=1 // pred_check
      _
    $region3: #{tpu_custom_call.1} parent=1 // pred_check_branch
      %12 = sbr.rel (0) target = $region5
    $region4: #{tpu_custom_call.1} parent=1 // pred_region
      %s14 = ssub.s32 128, 128
      %15 = vsyncadd [#allocation3], %s14
      %s17 = sshll.u32 [#allocation2], 4
      %s18 = int_to_ptr.vmem [resolvable:$true] %s17
      %20 = dma.hbm_to_vmem [thread:$0]  %s0, 128, %s18, [#allocation3]
    $region5: #{tpu_custom_call.1} parent=1 // pred_fallthru
      _
    // Predicated region
    $region6: #{tpu_custom_call.1} parent=1 // pred_check
      _
    $region7: #{tpu_custom_call.1} parent=1 // pred_check_branch
      %22 = sbr.rel (0) target = $region9
    $region8: #{tpu_custom_call.1} parent=1 // pred_region
      %s24 = ssub.s32 512, 512
      %25 = vsyncadd [#allocation6], %s24
      %s26 = sshll.u32 [#allocation5], 4
      %s27 = int_to_ptr.vmem [resolvable:$true] %s26
      %32 = dma.hbm_to_vmem [thread:$0]  %s1, 512, %s27, [#allocation6], 128, 128, 8
    $region9: #{tpu_custom_call.1} parent=1 // pred_fallthru
      _
    // Predicated region
    $region10: #{tpu_custom_call.1} parent=1 // pred_check
      _
    $region11: #{tpu_custom_call.1} parent=1 // pred_check_branch
      %34 = sbr.rel (0) target = $region13
    $region12: #{tpu_custom_call.1} parent=1 // pred_region
      _
    $region13: #{tpu_custom_call.1} parent=1 // pred_fallthru
      _
    // Predicated region
    $region14: #{tpu_custom_call.1} parent=1 // pred_check
      _
    $region15: #{tpu_custom_call.1} parent=1 // pred_check_branch
      %36 = sbr.rel (0) target = $region17
    $region16: #{tpu_custom_call.1} parent=1 // pred_region
      %37 = dma.done [#allocation3], 128
    $region17: #{tpu_custom_call.1} parent=1 // pred_fallthru
      _
    // Predicated region
    $region18: #{tpu_custom_call.1} parent=1 // pred_check
      _
    $region19: #{tpu_custom_call.1} parent=1 // pred_check_branch
      %39 = sbr.rel (0) target = $region21
    $region20: #{tpu_custom_call.1} parent=1 // pred_region
      %40 = dma.done [#allocation6], 512
    $region21: #{tpu_custom_call.1} parent=1 // pred_fallthru
      _
    %v41 = vld [vmem:[#allocation2] sm:$0xff]
    %v42 = vld [vmem:[#allocation5] sm:$0xff]
    %v43 = vld [vmem:[#allocation5 + $0x8] sm:$0xff]
    %v44 = vld [vmem:[#allocation5 + $0x10] sm:$0xff]
    %v45 = vld [vmem:[#allocation5 + $0x18] sm:$0xff]
    %v46 = vld [vmem:[%s2] sm:$0x1]
    %v47 = vlaneseq
    %v48 = vshrl.u32 %v47, 7
    %v49 = vsub.s32 0, %v48
    %v50 = vrot.slane %v46, %v49
    %vm51 = vcmask 261120
    %v53 = vsel %vm51, %v41, 0
    %55 = vmatprep.subr.mxu0 0.0
    %56 = vmatpush1.msra.mxu0 %v42
    %57 = vmatprep.subr.mxu0 0.0
    %58 = vmatpush1.msra.mxu0 %v43
    %59 = vmatprep.subr.mxu0 0.0
    %60 = vmatpush1.msra.mxu0 %v44
    %61 = vmatprep.subr.mxu0 0.0
    %62 = vmatpush1.msra.mxu0 %v45
    %63 = vmatprep.subr.mxu0 0.0
    %64 = vmatpush1.msra.mxu0 0.0
    %65 = vmatprep.subr.mxu0 0.0
    %66 = vmatpush1.msra.mxu0 0.0
    %67 = vmatprep.subr.mxu0 0.0
    %68 = vmatpush1.msra.mxu0 0.0
    %69 = vmatprep.subr.mxu0 0.0
    %70 = vmatpush1.msra.mxu0 0.0
    %71 = vmatprep.subr.mxu0 0.0
    %72 = vmatpush1.msra.mxu0 0.0
    %73 = vmatprep.subr.mxu0 0.0
    %74 = vmatpush1.msra.mxu0 0.0
    %75 = vmatprep.subr.mxu0 0.0
    %76 = vmatpush1.msra.mxu0 0.0
    %77 = vmatprep.subr.mxu0 0.0
    %78 = vmatpush1.msra.mxu0 0.0
    %79 = vmatprep.subr.mxu0 0.0
    %80 = vmatpush1.msra.mxu0 0.0
    %81 = vmatprep.subr.mxu0 0.0
    %82 = vmatpush1.msra.mxu0 0.0
    %83 = vmatprep.subr.mxu0 0.0
    %84 = vmatpush1.msra.mxu0 0.0
    %85 = vmatprep.subr.mxu0 0.0
    %86 = vmatpush1.msra.mxu0 0.0
    %87 = vmatprep.subr.mxu0 0.0
    %88 = vmatpush1.msra.mxu0 0.0
    %89 = vmatprep.subr.mxu0 0.0
    %90 = vmatpush1.msra.mxu0 0.0
    %91 = vmatprep.subr.mxu0 0.0
    %92 = vmatpush1.msra.mxu0 0.0
    %93 = vmatprep.subr.mxu0 0.0
    %94 = vmatpush1.msra.mxu0 0.0
    %95 = vmatprep.subr.mxu0 0.0
    %96 = vmatpush1.msra.mxu0 0.0
    %97 = vmatprep.subr.mxu0 0.0
    %98 = vmatpush1.msra.mxu0 0.0
    %99 = vmatprep.subr.mxu0 0.0
    %100 = vmatpush1.msra.mxu0 0.0
    %101 = vmatprep.subr.mxu0 0.0
    %102 = vmatpush1.msra.mxu0 0.0
    %103 = vmatprep.subr.mxu0 0.0
    %104 = vmatpush1.msra.mxu0 0.0
    %105 = vmatprep.subr.mxu0 0.0
    %106 = vmatpush1.msra.mxu0 0.0
    %107 = vmatprep.subr.mxu0 0.0
    %108 = vmatpush1.msra.mxu0 0.0
    %109 = vmatprep.subr.mxu0 0.0
    %110 = vmatpush1.msra.mxu0 0.0
    %111 = vmatprep.subr.mxu0 0.0
    %112 = vmatpush1.msra.mxu0 0.0
    %113 = vmatprep.subr.mxu0 0.0
    %114 = vmatpush1.msra.mxu0 0.0
    %115 = vmatprep.subr.mxu0 0.0
    %116 = vmatpush1.msra.mxu0 0.0
    %117 = vmatprep.subr.mxu0 0.0
    %118 = vmatpush1.msra.mxu0 0.0
    %119 = vmatprep.mubr.f32.mxu0 0.0
    %120 = vmatmul.mubr.f32.gmra.mrb[0].mxu0 %v53
    %v121 = vpop.f32.mrb[0].mxu0
    %v122 = vadd.f32 %v50, %v121
    %v123 = vpop.f32.mrb[0].mxu0
    %124 = vdwg.mxu0
    %v125 = vmax.f32 %v122, 0.0
    %v126 = vrot.slane %v125, 4
    %v127 = vadd.f32 %v125, %v126
    %v128 = vrot.slane %v127, 2
    %v129 = vadd.f32 %v127, %v128
    %v130 = vrot.slane %v129, 1
    %v131 = vadd.f32 %v129, %v130
    %v132 = vmul.f32 %v131, 0.125
    %v133 = vsub.f32 %v125, %v132
    %v134 = vmul.f32 %v133, %v133
    %v135 = vrot.slane %v134, 4
    %v136 = vadd.f32 %v134, %v135
    %v137 = vrot.slane %v136, 2
    %v138 = vadd.f32 %v136, %v137
    %v139 = vrot.slane %v138, 1
    %v140 = vadd.f32 %v138, %v139
    %v141 = vmul.f32 %v140, 0.125
    %v142 = vadd.f32 %v141, 1e-05
    %v143 = vrsqrt.pop %v142
    %v144 = vld [vmem:[%s2 + $0x1] sm:$0x1]
    %v145 = vld [vmem:[%s2 + $0x2] sm:$0x1]
    %v146 = vmul.f32 %v144, %v143
    %v147 = vlaneseq
    %v148 = vshrl.u32 %v147, 7
    %v149 = vsub.s32 0, %v148
    %v150 = vrot.slane %v146, %v149
    %v151 = vmul.f32 %v133, %v150
    %v152 = vlaneseq
    %v153 = vshrl.u32 %v152, 7
    %v154 = vsub.s32 0, %v153
    %v155 = vrot.slane %v145, %v154
    %v156 = vadd.f32 %v151, %v155
    %157 = vst [vmem:[#allocation7] sm:$0xff] %v156
    // Predicated region
    $region22: #{tpu_custom_call.1} parent=1 // pred_check
      _
    $region23: #{tpu_custom_call.1} parent=1 // pred_check_branch
      %159 = sbr.rel (0) target = $region25
    $region24: #{tpu_custom_call.1} parent=1 // pred_region
      %s161 = ssub.s32 128, 128
      %162 = vsyncadd [#allocation4], %s161
      %s164 = sshll.u32 [#allocation7], 4
      %s165 = int_to_ptr.vmem [resolvable:$true] %s164
      %167 = dma.vmem_to_hbm [thread:$0]  %s165, 128, %s3, [#allocation4]
    $region25: #{tpu_custom_call.1} parent=1 // pred_fallthru
      _
    // Predicated region
    $region26: #{tpu_custom_call.1} parent=1 // pred_check
      _
    $region27: #{tpu_custom_call.1} parent=1 // pred_check_branch
      %169 = sbr.rel (0) target = $region29
    $region28: #{tpu_custom_call.1} parent=1 // pred_region
      %170 = dma.done [#allocation4], 128
    $region29: #{tpu_custom_call.1} parent=1 // pred_fallthru
      _
    %171 = vsyncpa [#allocation3], 1
    %172 = vsyncpa [#allocation6], 1
    %173 = vsyncpa [#allocation4], 1

</llo_original>
